<compile_context>
chip_gen: v7x
topology: tpu7x:2x2x1
jax: 0.10.0
libtpu: 0.0.40
codegen_flags: <defaults>
</compile_context>

<pallas_src>
import jax
import jax.numpy as jnp
from jax.experimental import pallas as pl
from jax.experimental.pallas import tpu as pltpu


LANE = 128
SUBLANE = 8
MAX_TILE_ROWS = 2048   # single grid step up to this many batch rows


def _round_up(x, m):
    return (x + m - 1) // m * m


def critic_kernel(s_ref, a_ref, w1s_ref, w1a_ref, b1_ref, w2_ref, b2_ref,
                  w3_ref, b3_ref, q_ref):
    # fc1 (split over state/action; removes the need for a host-side concat)
    h1 = jnp.dot(s_ref[...], w1s_ref[...], preferred_element_type=jnp.float32)
    h1 = h1 + jnp.dot(a_ref[...], w1a_ref[...],
                      preferred_element_type=jnp.float32)
    h1 = jnp.maximum(h1 + b1_ref[...], 0.0)

    # fc2 + relu (lane-dense: hidden dims padded to 128)
    h2 = jnp.dot(h1.astype(w2_ref.dtype), w2_ref[...],
                 preferred_element_type=jnp.float32)
    h2 = jnp.maximum(h2 + b2_ref[...], 0.0)

    # q1: (TB, H) x (1, H) -> VPU multiply + XLU lane reduce instead of a
    # 1-column MXU matmul.
    q = jnp.sum(h2 * w3_ref[...], axis=-1, keepdims=True) + b3_ref[...]

    # Narrow (TB, 1) store: output traffic is tiny, no broadcast slab.
    q_ref[...] = q.astype(q_ref.dtype)


def pack_params(params, input_dims, dtype=jnp.float32):
    """One-time repacking of the (in, out)-layout params for the kernel:
    split fc1's weight over state/action rows and zero-pad hidden dims to
    multiples of 128 lanes (exact: padded columns stay zero through relu).
    `dtype` (e.g. jnp.bfloat16) applies to the MXU weight operands only;
    biases and the final q1 row stay f32 for the post-matmul VPU math."""
    w1, b1 = params["w1"], params["b1"]
    w2, b2 = params["w2"], params["b2"]
    w3, b3 = params["w3"], params["b3"]

    fc1 = w1.shape[1]
    fc2 = w2.shape[1]
    h1p = _round_up(fc1, LANE)
    h2p = _round_up(fc2, LANE)

    w1_s = jnp.pad(w1[:input_dims], ((0, 0), (0, h1p - fc1))).astype(dtype)
    w1_a = jnp.pad(w1[input_dims:], ((0, 0), (0, h1p - fc1))).astype(dtype)
    b1_p = jnp.pad(b1, ((0, 0), (0, h1p - fc1))).astype(jnp.float32)
    w2_p = jnp.pad(w2, ((0, h1p - fc1), (0, h2p - fc2))).astype(dtype)
    b2_p = jnp.pad(b2, ((0, 0), (0, h2p - fc2))).astype(jnp.float32)
    w3_row = jnp.pad(w3.reshape(1, fc2),
                     ((0, 0), (0, h2p - fc2))).astype(jnp.float32)
    b3_p = b3.reshape(1, 1).astype(jnp.float32)

    return dict(w1_s=w1_s, w1_a=w1_a, b1=b1_p, w2=w2_p, b2=b2_p,
                w3_row=w3_row, b3=b3_p)


def _batch_tiling(B):
    """Pad B to a sublane multiple, then pick a tile that divides the padded
    batch. Single step for small B; an EVEN number of steps for large B so the
    'parallel' grid axis can actually engage both v7x TensorCores."""
    bp8 = _round_up(max(B, SUBLANE), SUBLANE)
    if bp8 <= MAX_TILE_ROWS:
        return bp8, bp8, 1
    nsteps = pl.cdiv(bp8, MAX_TILE_ROWS)
    if nsteps % 2:
        nsteps += 1
    tb = _round_up(pl.cdiv(bp8, nsteps), SUBLANE)
    return tb * nsteps, tb, nsteps


@jax.jit
def critic_forward(state, action, packed):
    """Full critic MLP in one Pallas kernel, tiled over the batch."""
    B, ds = state.shape
    _, da = action.shape

    w1_s, w1_a = packed["w1_s"], packed["w1_a"]
    b1, w2, b2 = packed["b1"], packed["w2"], packed["b2"]
    w3_row, b3 = packed["w3_row"], packed["b3"]
    h1p = w1_s.shape[1]
    h2p = w2.shape[1]

    # Matmul operands in the packed weight dtype (f32 default, bf16 optional).
    cdtype = w1_s.dtype
    state = state.astype(cdtype)
    action = action.astype(cdtype)

    bp, tb, nsteps = _batch_tiling(B)
    if bp != B:
        state = jnp.pad(state, ((0, bp - B), (0, 0)))
        action = jnp.pad(action, ((0, bp - B), (0, 0)))

    resident = lambda a: pl.BlockSpec(a.shape, lambda i: (0,) * a.ndim)

    act_bytes = jnp.dtype(cdtype).itemsize
    flops = 2 * bp * (ds * h1p + da * h1p + h1p * h2p + h2p)
    bytes_accessed = (act_bytes * (bp * (ds + da) + (ds + da) * h1p + h1p * h2p)
                      + 4 * (bp + h1p + 2 * h2p + 1))

    out = pl.pallas_call(
        critic_kernel,
        out_shape=jax.ShapeDtypeStruct((bp, 1), jnp.float32),
        grid=(nsteps,),
        in_specs=[
            pl.BlockSpec((tb, ds), lambda i: (i, 0)),   # state rows
            pl.BlockSpec((tb, da), lambda i: (i, 0)),   # action rows
            resident(w1_s), resident(w1_a), resident(b1),
            resident(w2), resident(b2),
            resident(w3_row), resident(b3),
        ],
        out_specs=pl.BlockSpec((tb, 1), lambda i: (i, 0)),
        compiler_params=pltpu.CompilerParams(
            dimension_semantics=("parallel",)),
        cost_estimate=pl.CostEstimate(
            flops=flops, transcendentals=0, bytes_accessed=bytes_accessed),
    )(state, action, w1_s, w1_a, b1, w2, b2, w3_row, b3)

    return out[:B]

    # TODO(synk): TD3's twin critics (Q1/Q2) share (state, action) and could be
    # fused into one pallas_call by concatenating their packed weights along
    # the output-feature axis (doubles MXU N-width, halves call/DMA overhead);
    # kept single-critic here to match this module's forward exactly.


def init_params(key, input_dims, n_actions, fc1_dims, fc2_dims):
    """PyTorch nn.Linear-style init; weights stored as (in_features, out_features)."""
    def linear(k, fan_in, fan_out):
        kw, kb = jax.random.split(k)
        bound = 1.0 / jnp.sqrt(fan_in)
        w = jax.random.uniform(kw, (fan_in, fan_out), jnp.float32, -bound, bound)
        b = jax.random.uniform(kb, (1, fan_out), jnp.float32, -bound, bound)
        return w, b

    k1, k2, k3 = jax.random.split(key, 3)
    in_feats = input_dims + n_actions
    w1, b1 = linear(k1, in_feats, fc1_dims)
    w2, b2 = linear(k2, fc1_dims, fc2_dims)
    w3, b3 = linear(k3, fc2_dims, 1)
    return dict(w1=w1, b1=b1, w2=w2, b2=b2, w3=w3, b3=b3)


def reference_forward(state, action, params):
    x = jnp.concatenate([state, action], axis=1)
    h1 = jnp.maximum(x @ params["w1"] + params["b1"], 0.0)
    h2 = jnp.maximum(h1 @ params["w2"] + params["b2"], 0.0)
    return h2 @ params["w3"] + params["b3"]


if __name__ == "__main__":
    # Small shapes consistent with the module's constructor:
    #   input_dims=[16], n_actions=4, fc1_dims=32, fc2_dims=32
    INPUT_DIMS, N_ACTIONS, FC1, FC2 = 16, 4, 32, 32

    key = jax.random.PRNGKey(0)
    k_state, k_action, k_params = jax.random.split(key, 3)
    params = init_params(k_params, INPUT_DIMS, N_ACTIONS, FC1, FC2)
    packed = pack_params(params, INPUT_DIMS)   # one-time repack/pad (f32)

    # Test 1: small batch -> single grid step.
    B = 8
    state = jax.random.normal(k_state, (B, INPUT_DIMS), jnp.float32)
    action = jax.random.normal(k_action, (B, N_ACTIONS), jnp.float32)
    q = jax.block_until_ready(critic_forward(state, action, packed))
    q_ref = reference_forward(state, action, params)
    assert q.shape == (B, 1)
    assert jnp.allclose(q, q_ref, atol=2e-5, rtol=2e-5), "mismatch (B=8)"

    # Test 2: large batch -> multi-step 'parallel' grid (exercises tiling path).
    B2 = 2600
    state2 = jax.random.normal(k_state, (B2, INPUT_DIMS), jnp.float32)
    action2 = jax.random.normal(k_action, (B2, N_ACTIONS), jnp.float32)
    q2 = jax.block_until_ready(critic_forward(state2, action2, packed))
    q2_ref = reference_forward(state2, action2, params)
    assert q2.shape == (B2, 1)
    assert jnp.allclose(q2, q2_ref, atol=2e-5, rtol=2e-5), "mismatch (B=2600)"

    print("KERNEL_OK")
</pallas_src>

<mosaic_0001>
module attributes {stable_mosaic.version = 11 : i64} {
  func.func @critic_kernel(%arg0: i32, %arg1: memref<8x16xf32, #tpu.memory_space<vmem>>, %arg2: memref<8x4xf32, #tpu.memory_space<vmem>>, %arg3: memref<16x128xf32, #tpu.memory_space<vmem>>, %arg4: memref<4x128xf32, #tpu.memory_space<vmem>>, %arg5: memref<1x128xf32, #tpu.memory_space<vmem>>, %arg6: memref<128x128xf32, #tpu.memory_space<vmem>>, %arg7: memref<1x128xf32, #tpu.memory_space<vmem>>, %arg8: memref<1x128xf32, #tpu.memory_space<vmem>>, %arg9: memref<1x1xf32, #tpu.memory_space<vmem>>, %arg10: memref<8x1xf32, #tpu.memory_space<vmem>>) attributes {dimension_semantics = [#tpu.dimension_semantics<parallel>], iteration_bounds = array<i64: 1>, scalar_prefetch = 0 : i64, scratch_operands = 0 : i64, tpu.core_type = #tpu.core_type<tc>, window_params = [{transform_indices = @transform_0, window_bounds = array<i64: 8, 16>}, {transform_indices = @transform_1, window_bounds = array<i64: 8, 4>}, {pipeline_mode = #tpu.pipeline_mode<synchronous>, transform_indices = @transform_2, window_bounds = array<i64: 16, 128>}, {pipeline_mode = #tpu.pipeline_mode<synchronous>, transform_indices = @transform_3, window_bounds = array<i64: 4, 128>}, {pipeline_mode = #tpu.pipeline_mode<synchronous>, transform_indices = @transform_4, window_bounds = array<i64: 1, 128>}, {pipeline_mode = #tpu.pipeline_mode<synchronous>, transform_indices = @transform_5, window_bounds = array<i64: 128, 128>}, {pipeline_mode = #tpu.pipeline_mode<synchronous>, transform_indices = @transform_6, window_bounds = array<i64: 1, 128>}, {pipeline_mode = #tpu.pipeline_mode<synchronous>, transform_indices = @transform_7, window_bounds = array<i64: 1, 128>}, {pipeline_mode = #tpu.pipeline_mode<synchronous>, transform_indices = @transform_8, window_bounds = array<i64: 1, 1>}, {transform_indices = @transform_9, window_bounds = array<i64: 8, 1>}]} {
    %c0 = arith.constant 0 : index
    %c0_0 = arith.constant 0 : index
    %0 = vector.load %arg1[%c0, %c0_0] : memref<8x16xf32, #tpu.memory_space<vmem>>, vector<8x16xf32>
    %c0_1 = arith.constant 0 : index
    %c0_2 = arith.constant 0 : index
    %1 = vector.load %arg3[%c0_1, %c0_2] : memref<16x128xf32, #tpu.memory_space<vmem>>, vector<16x128xf32>
    %cst = arith.constant dense<0.000000e+00> : vector<8x128xf32>
    %2 = tpu.matmul %0, %1, %cst {dimension_numbers = #tpu.dot_dimension_numbers<[1], [0], [0], [1], [0, 0, 1, 1], [], []>} : vector<8x16xf32>, vector<16x128xf32>, vector<8x128xf32> -> vector<8x128xf32>
    %c0_3 = arith.constant 0 : index
    %c0_4 = arith.constant 0 : index
    %3 = vector.load %arg2[%c0_3, %c0_4] : memref<8x4xf32, #tpu.memory_space<vmem>>, vector<8x4xf32>
    %c0_5 = arith.constant 0 : index
    %c0_6 = arith.constant 0 : index
    %4 = vector.load %arg4[%c0_5, %c0_6] : memref<4x128xf32, #tpu.memory_space<vmem>>, vector<4x128xf32>
    %cst_7 = arith.constant dense<0.000000e+00> : vector<8x128xf32>
    %5 = tpu.matmul %3, %4, %cst_7 {dimension_numbers = #tpu.dot_dimension_numbers<[1], [0], [0], [1], [0, 0, 1, 1], [], []>} : vector<8x4xf32>, vector<4x128xf32>, vector<8x128xf32> -> vector<8x128xf32>
    %6 = arith.addf %2, %5 : vector<8x128xf32>
    %c0_8 = arith.constant 0 : index
    %c0_9 = arith.constant 0 : index
    %7 = vector.load %arg5[%c0_8, %c0_9] : memref<1x128xf32, #tpu.memory_space<vmem>>, vector<1x128xf32>
    %8 = vector.broadcast %7 : vector<1x128xf32> to vector<8x128xf32>
    %9 = arith.addf %6, %8 : vector<8x128xf32>
    %cst_10 = arith.constant 0.000000e+00 : f32
    %10 = vector.broadcast %cst_10 : f32 to vector<8x128xf32>
    %11 = arith.maximumf %9, %10 : vector<8x128xf32>
    %c0_11 = arith.constant 0 : index
    %c0_12 = arith.constant 0 : index
    %12 = vector.load %arg6[%c0_11, %c0_12] : memref<128x128xf32, #tpu.memory_space<vmem>>, vector<128x128xf32>
    %cst_13 = arith.constant dense<0.000000e+00> : vector<8x128xf32>
    %13 = tpu.matmul %11, %12, %cst_13 {dimension_numbers = #tpu.dot_dimension_numbers<[1], [0], [0], [1], [0, 0, 1, 1], [], []>} : vector<8x128xf32>, vector<128x128xf32>, vector<8x128xf32> -> vector<8x128xf32>
    %c0_14 = arith.constant 0 : index
    %c0_15 = arith.constant 0 : index
    %14 = vector.load %arg7[%c0_14, %c0_15] : memref<1x128xf32, #tpu.memory_space<vmem>>, vector<1x128xf32>
    %15 = vector.broadcast %14 : vector<1x128xf32> to vector<8x128xf32>
    %16 = arith.addf %13, %15 : vector<8x128xf32>
    %cst_16 = arith.constant 0.000000e+00 : f32
    %17 = vector.broadcast %cst_16 : f32 to vector<8x128xf32>
    %18 = arith.maximumf %16, %17 : vector<8x128xf32>
    %c0_17 = arith.constant 0 : index
    %c0_18 = arith.constant 0 : index
    %19 = vector.load %arg8[%c0_17, %c0_18] : memref<1x128xf32, #tpu.memory_space<vmem>>, vector<1x128xf32>
    %20 = vector.broadcast %19 : vector<1x128xf32> to vector<8x128xf32>
    %21 = arith.mulf %18, %20 : vector<8x128xf32>
    %cst_19 = arith.constant dense<0.000000e+00> : vector<8xf32>
    %22 = vector.multi_reduction <add>, %21, %cst_19 [1] : vector<8x128xf32> to vector<8xf32>
    %23 = vector.shape_cast %22 : vector<8xf32> to vector<8x1xf32>
    %c0_20 = arith.constant 0 : index
    %c0_21 = arith.constant 0 : index
    %24 = vector.load %arg9[%c0_20, %c0_21] : memref<1x1xf32, #tpu.memory_space<vmem>>, vector<1x1xf32>
    %25 = vector.broadcast %24 : vector<1x1xf32> to vector<8x1xf32>
    %26 = arith.addf %23, %25 : vector<8x1xf32>
    %c0_22 = arith.constant 0 : index
    %c0_23 = arith.constant 0 : index
    %27 = vector.load %arg10[%c0_22, %c0_23] : memref<8x1xf32, #tpu.memory_space<vmem>>, vector<8x1xf32>
    tpu.vector_store %arg10[%c0_22, %c0_23], %26 {strides = array<i32>} : memref<8x1xf32, #tpu.memory_space<vmem>>, vector<8x1xf32>,
    return
  }
  func.func @transform_0(%arg0: i32) -> (i32, i32) {
    %c0_i32 = arith.constant 0 : i32
    %c0_i32_0 = arith.constant 0 : i32
    return %arg0, %c0_i32 : i32, i32
  }
  func.func @transform_1(%arg0: i32) -> (i32, i32) {
    %c0_i32 = arith.constant 0 : i32
    %c0_i32_0 = arith.constant 0 : i32
    return %arg0, %c0_i32 : i32, i32
  }
  func.func @transform_2(%arg0: i32) -> (i32, i32) {
    %c0_i32 = arith.constant 0 : i32
    %c0_i32_0 = arith.constant 0 : i32
    %c0_i32_1 = arith.constant 0 : i32
    return %c0_i32, %c0_i32_0 : i32, i32
  }
  func.func @transform_3(%arg0: i32) -> (i32, i32) {
    %c0_i32 = arith.constant 0 : i32
    %c0_i32_0 = arith.constant 0 : i32
    %c0_i32_1 = arith.constant 0 : i32
    return %c0_i32, %c0_i32_0 : i32, i32
  }
  func.func @transform_4(%arg0: i32) -> (i32, i32) {
    %c0_i32 = arith.constant 0 : i32
    %c0_i32_0 = arith.constant 0 : i32
    %c0_i32_1 = arith.constant 0 : i32
    return %c0_i32, %c0_i32_0 : i32, i32
  }
  func.func @transform_5(%arg0: i32) -> (i32, i32) {
    %c0_i32 = arith.constant 0 : i32
    %c0_i32_0 = arith.constant 0 : i32
    %c0_i32_1 = arith.constant 0 : i32
    return %c0_i32, %c0_i32_0 : i32, i32
  }
  func.func @transform_6(%arg0: i32) -> (i32, i32) {
    %c0_i32 = arith.constant 0 : i32
    %c0_i32_0 = arith.constant 0 : i32
    %c0_i32_1 = arith.constant 0 : i32
    return %c0_i32, %c0_i32_0 : i32, i32
  }
  func.func @transform_7(%arg0: i32) -> (i32, i32) {
    %c0_i32 = arith.constant 0 : i32
    %c0_i32_0 = arith.constant 0 : i32
    %c0_i32_1 = arith.constant 0 : i32
    return %c0_i32, %c0_i32_0 : i32, i32
  }
  func.func @transform_8(%arg0: i32) -> (i32, i32) {
    %c0_i32 = arith.constant 0 : i32
    %c0_i32_0 = arith.constant 0 : i32
    %c0_i32_1 = arith.constant 0 : i32
    return %c0_i32, %c0_i32_0 : i32, i32
  }
  func.func @transform_9(%arg0: i32) -> (i32, i32) {
    %c0_i32 = arith.constant 0 : i32
    %c0_i32_0 = arith.constant 0 : i32
    return %arg0, %c0_i32 : i32, i32
  }
}

</mosaic_0001>

<llo_original>
// kernel: critic_forward.1
$region0: #{critic_forward.1}
  #allocation0 [shape = 'u32[]', space=smem, size = 0x4, offset = 0x4, fixed_abs, tag = 'smem constant byte address 0x4 - core index']
  #allocation1 [shape = 'u32[144,128]{1,0:T(1,128)}', space=vmem, size = 0x12000, scoped, tag = 'internal scratch']
  #allocation2 [shape = 'f32[1,1]{1,0:T(1,128)S(1)}', space=vmem, size = 0x200, scoped, tag = 'scoped memory for critic_forward.1']
  %s0 = inlined_call_operand.vmem [shape: f32[8,16], index: 0, kind: input, shape index: {}]
  %s1 = inlined_call_operand.vmem [shape: f32[8,4], index: 1, kind: input, shape index: {}]
  %s2 = inlined_call_operand.vmem [shape: f32[16,128], index: 2, kind: input, shape index: {}]
  %s3 = inlined_call_operand.vmem [shape: f32[4,128], index: 3, kind: input, shape index: {}]
  %s4 = inlined_call_operand.vmem [shape: f32[1,128], index: 4, kind: input, shape index: {}]
  %s5 = inlined_call_operand.hbm [shape: f32[128,128], index: 5, kind: input, shape index: {}]
  %s6 = inlined_call_operand.vmem [shape: f32[1,128], index: 6, kind: input, shape index: {}]
  %s7 = inlined_call_operand.vmem [shape: f32[1,128], index: 7, kind: input, shape index: {}]
  %s8 = inlined_call_operand.<no memory space> [shape: f32[1,1], index: 8, kind: input, shape index: {}]
  %s9 = inlined_call_operand.vmem [shape: f32[8,1], index: 9, kind: output, shape index: {}]
  %s10 = sld [smem:[#allocation0]]
  $region50: #{critic_forward.1} parent=0
    _
  %s12 = ssub.s32 1, %s10
  %s13 = scalar_select 0, %s12, %s10
  %v14 = vstv %s8
  %15 = vst [vmem:[#allocation2] sm:$0x1] %v14
  $region1: #{critic_forward.1} parent=0
    #allocation3 [shape = 'u8[65536]{0}', space=vmem, size = 0x10000, scoped, tag = 'input window, operand 5, single buffered']
    #allocation4 [shape = 's32[1]{0}', space=sflag, size = 0x4, scoped, tag = 'scoped memory for critic_forward.1']
    %16 = vsyncpa [#allocation4], 0
    // Predicated region
    $region2: #{critic_forward.1} parent=1 // pred_check
      _
    $region3: #{critic_forward.1} parent=1 // pred_check_branch
      %18 = sbr.rel (0) target = $region5
    $region4: #{critic_forward.1} parent=1 // pred_region
      _
    $region5: #{critic_forward.1} parent=1 // pred_fallthru
      _
    // Predicated region
    $region6: #{critic_forward.1} parent=1 // pred_check
      _
    $region7: #{critic_forward.1} parent=1 // pred_check_branch
      %20 = sbr.rel (0) target = $region9
    $region8: #{critic_forward.1} parent=1 // pred_region
      _
    $region9: #{critic_forward.1} parent=1 // pred_fallthru
      _
    // Predicated region
    $region10: #{critic_forward.1} parent=1 // pred_check
      _
    $region11: #{critic_forward.1} parent=1 // pred_check_branch
      %22 = sbr.rel (0) target = $region13
    $region12: #{critic_forward.1} parent=1 // pred_region
      _
    $region13: #{critic_forward.1} parent=1 // pred_fallthru
      _
    // Predicated region
    $region14: #{critic_forward.1} parent=1 // pred_check
      _
    $region15: #{critic_forward.1} parent=1 // pred_check_branch
      %24 = sbr.rel (0) target = $region17
    $region16: #{critic_forward.1} parent=1 // pred_region
      _
    $region17: #{critic_forward.1} parent=1 // pred_fallthru
      _
    // Predicated region
    $region18: #{critic_forward.1} parent=1 // pred_check
      _
    $region19: #{critic_forward.1} parent=1 // pred_check_branch
      %26 = sbr.rel (0) target = $region21
    $region20: #{critic_forward.1} parent=1 // pred_region
      _
    $region21: #{critic_forward.1} parent=1 // pred_fallthru
      _
    // Predicated region
    $region22: #{critic_forward.1} parent=1 // pred_check
      _
    $region23: #{critic_forward.1} parent=1 // pred_check_branch
      %28 = sbr.rel (0) target = $region25
    $region24: #{critic_forward.1} parent=1 // pred_region
      %s30 = ssub.s32 2048, 2048
      %31 = vsyncadd [#allocation4], %s30
      %s32 = sshll.u32 [#allocation3], 4
      %s33 = int_to_ptr.vmem [resolvable:$true] %s32
      %38 = dma.hbm_to_vmem [thread:$0]  %s5, 2048, %s33, [#allocation4], 128, 128, 8
    $region25: #{critic_forward.1} parent=1 // pred_fallthru
      _
    // Predicated region
    $region26: #{critic_forward.1} parent=1 // pred_check
      _
    $region27: #{critic_forward.1} parent=1 // pred_check_branch
      %40 = sbr.rel (0) target = $region29
    $region28: #{critic_forward.1} parent=1 // pred_region
      _
    $region29: #{critic_forward.1} parent=1 // pred_fallthru
      _
    // Predicated region
    $region30: #{critic_forward.1} parent=1 // pred_check
      _
    $region31: #{critic_forward.1} parent=1 // pred_check_branch
      %42 = sbr.rel (0) target = $region33
    $region32: #{critic_forward.1} parent=1 // pred_region
      _
    $region33: #{critic_forward.1} parent=1 // pred_fallthru
      _
    // Predicated region
    $region34: #{critic_forward.1} parent=1 // pred_check
      _
    $region35: #{critic_forward.1} parent=1 // pred_check_branch
      %44 = sbr.rel (0) target = $region37
    $region36: #{critic_forward.1} parent=1 // pred_region
      _
    $region37: #{critic_forward.1} parent=1 // pred_fallthru
      _
    // Predicated region
    $region38: #{critic_forward.1} parent=1 // pred_check
      _
    $region39: #{critic_forward.1} parent=1 // pred_check_branch
      %46 = sbr.rel (0) target = $region41
    $region40: #{critic_forward.1} parent=1 // pred_region
      %47 = dma.done [#allocation4], 2048
    $region41: #{critic_forward.1} parent=1 // pred_fallthru
      _
    %v48 = vld [vmem:[%s0] sm:$0xff]
    %v49 = vld [vmem:[%s2] sm:$0xff]
    %v50 = vld [vmem:[%s2 + $0x8] sm:$0xff]
    %v51 = vld [vmem:[%s1] sm:$0xff]
    %v52 = vld [vmem:[%s3] sm:$0xf]
    %vm53 = vcmask 31744
    %v55 = vsel %vm53, %v51, 0
    %vm57 = vcmask 1043456
    %v59 = vsel %vm57, %v52, 0
    %61 = vmatprep.subr.mxu0 0.0
    %62 = vmatpush1.msra.mxu0 %v59
    %63 = vmatprep.subr.mxu0 0.0
    %64 = vmatpush1.msra.mxu0 0.0
    %65 = vmatprep.subr.mxu0 0.0
    %66 = vmatpush1.msra.mxu0 0.0
    %67 = vmatprep.subr.mxu0 0.0
    %68 = vmatpush1.msra.mxu0 0.0
    %69 = vmatprep.subr.mxu0 0.0
    %70 = vmatpush1.msra.mxu0 0.0
    %71 = vmatprep.subr.mxu0 0.0
    %72 = vmatpush1.msra.mxu0 0.0
    %73 = vmatprep.subr.mxu0 0.0
    %74 = vmatpush1.msra.mxu0 0.0
    %75 = vmatprep.subr.mxu0 0.0
    %76 = vmatpush1.msra.mxu0 0.0
    %77 = vmatprep.subr.mxu0 0.0
    %78 = vmatpush1.msra.mxu0 0.0
    %79 = vmatprep.subr.mxu0 0.0
    %80 = vmatpush1.msra.mxu0 0.0
    %81 = vmatprep.subr.mxu0 0.0
    %82 = vmatpush1.msra.mxu0 0.0
    %83 = vmatprep.subr.mxu0 0.0
    %84 = vmatpush1.msra.mxu0 0.0
    %85 = vmatprep.subr.mxu0 0.0
    %86 = vmatpush1.msra.mxu0 0.0
    %87 = vmatprep.subr.mxu0 0.0
    %88 = vmatpush1.msra.mxu0 0.0
    %89 = vmatprep.subr.mxu0 0.0
    %90 = vmatpush1.msra.mxu0 0.0
    %91 = vmatprep.subr.mxu0 0.0
    %92 = vmatpush1.msra.mxu0 0.0
    %93 = vmatprep.subr.mxu0 0.0
    %94 = vmatpush1.msra.mxu0 0.0
    %95 = vmatprep.subr.mxu0 0.0
    %96 = vmatpush1.msra.mxu0 0.0
    %97 = vmatprep.subr.mxu0 0.0
    %98 = vmatpush1.msra.mxu0 0.0
    %99 = vmatprep.subr.mxu0 0.0
    %100 = vmatpush1.msra.mxu0 0.0
    %101 = vmatprep.subr.mxu0 0.0
    %102 = vmatpush1.msra.mxu0 0.0
    %103 = vmatprep.subr.mxu0 0.0
    %104 = vmatpush1.msra.mxu0 0.0
    %105 = vmatprep.subr.mxu0 0.0
    %106 = vmatpush1.msra.mxu0 0.0
    %107 = vmatprep.subr.mxu0 0.0
    %108 = vmatpush1.msra.mxu0 0.0
    %109 = vmatprep.subr.mxu0 0.0
    %110 = vmatpush1.msra.mxu0 0.0
    %111 = vmatprep.subr.mxu0 0.0
    %112 = vmatpush1.msra.mxu0 0.0
    %113 = vmatprep.subr.mxu0 0.0
    %114 = vmatpush1.msra.mxu0 0.0
    %115 = vmatprep.subr.mxu0 0.0
    %116 = vmatpush1.msra.mxu0 0.0
    %117 = vmatprep.subr.mxu0 0.0
    %118 = vmatpush1.msra.mxu0 0.0
    %119 = vmatprep.subr.mxu0 0.0
    %120 = vmatpush1.msra.mxu0 0.0
    %121 = vmatprep.subr.mxu0 0.0
    %122 = vmatpush1.msra.mxu0 0.0
    %123 = vmatprep.subr.mxu0 0.0
    %124 = vmatpush1.msra.mxu0 0.0
    %125 = vmatprep.mubr.f32.mxu0 0.0
    %126 = vmatmul.mubr.f32.gmra.mrb[0].mxu0 %v55
    %v127 = vpop.f32.mrb[0].mxu0
    %v128 = vadd.f32 0.0, %v127
    %v129 = vpop.f32.mrb[0].mxu0
    %130 = vdwg.mxu0
    %vm131 = vcmask 130048
    %v133 = vsel %vm131, %v48, 0
    %135 = vmatprep.subr.mxu0 0.0
    %136 = vmatpush1.msra.mxu0 %v49
    %137 = vmatprep.subr.mxu0 0.0
    %138 = vmatpush1.msra.mxu0 %v50
    %139 = vmatprep.subr.mxu0 0.0
    %140 = vmatpush1.msra.mxu0 0.0
    %141 = vmatprep.subr.mxu0 0.0
    %142 = vmatpush1.msra.mxu0 0.0
    %143 = vmatprep.subr.mxu0 0.0
    %144 = vmatpush1.msra.mxu0 0.0
    %145 = vmatprep.subr.mxu0 0.0
    %146 = vmatpush1.msra.mxu0 0.0
    %147 = vmatprep.subr.mxu0 0.0
    %148 = vmatpush1.msra.mxu0 0.0
    %149 = vmatprep.subr.mxu0 0.0
    %150 = vmatpush1.msra.mxu0 0.0
    %151 = vmatprep.subr.mxu0 0.0
    %152 = vmatpush1.msra.mxu0 0.0
    %153 = vmatprep.subr.mxu0 0.0
    %154 = vmatpush1.msra.mxu0 0.0
    %155 = vmatprep.subr.mxu0 0.0
    %156 = vmatpush1.msra.mxu0 0.0
    %157 = vmatprep.subr.mxu0 0.0
    %158 = vmatpush1.msra.mxu0 0.0
    %159 = vmatprep.subr.mxu0 0.0
    %160 = vmatpush1.msra.mxu0 0.0
    %161 = vmatprep.subr.mxu0 0.0
    %162 = vmatpush1.msra.mxu0 0.0
    %163 = vmatprep.subr.mxu0 0.0
    %164 = vmatpush1.msra.mxu0 0.0
    %165 = vmatprep.subr.mxu0 0.0
    %166 = vmatpush1.msra.mxu0 0.0
    %167 = vmatprep.subr.mxu0 0.0
    %168 = vmatpush1.msra.mxu0 0.0
    %169 = vmatprep.subr.mxu0 0.0
    %170 = vmatpush1.msra.mxu0 0.0
    %171 = vmatprep.subr.mxu0 0.0
    %172 = vmatpush1.msra.mxu0 0.0
    %173 = vmatprep.subr.mxu0 0.0
    %174 = vmatpush1.msra.mxu0 0.0
    %175 = vmatprep.subr.mxu0 0.0
    %176 = vmatpush1.msra.mxu0 0.0
    %177 = vmatprep.subr.mxu0 0.0
    %178 = vmatpush1.msra.mxu0 0.0
    %179 = vmatprep.subr.mxu0 0.0
    %180 = vmatpush1.msra.mxu0 0.0
    %181 = vmatprep.subr.mxu0 0.0
    %182 = vmatpush1.msra.mxu0 0.0
    %183 = vmatprep.subr.mxu0 0.0
    %184 = vmatpush1.msra.mxu0 0.0
    %185 = vmatprep.subr.mxu0 0.0
    %186 = vmatpush1.msra.mxu0 0.0
    %187 = vmatprep.subr.mxu0 0.0
    %188 = vmatpush1.msra.mxu0 0.0
    %189 = vmatprep.subr.mxu0 0.0
    %190 = vmatpush1.msra.mxu0 0.0
    %191 = vmatprep.subr.mxu0 0.0
    %192 = vmatpush1.msra.mxu0 0.0
    %193 = vmatprep.subr.mxu0 0.0
    %194 = vmatpush1.msra.mxu0 0.0
    %195 = vmatprep.subr.mxu0 0.0
    %196 = vmatpush1.msra.mxu0 0.0
    %197 = vmatprep.subr.mxu0 0.0
    %198 = vmatpush1.msra.mxu0 0.0
    %199 = vmatprep.mubr.f32.mxu0 0.0
    %200 = vmatmul.mubr.f32.gmra.mrb[0].mxu0 %v133
    %v201 = vpop.f32.mrb[0].mxu0
    %v202 = vadd.f32 %v128, %v201
    %v203 = vpop.f32.mrb[0].mxu0
    %204 = vdwg.mxu0
    %v205 = vld [vmem:[%s4] sm:$0x1]
    %v207 = vlaneseq
    %v208 = vshrl.u32 %v207, 7
    %v209 = vsub.s32 0, %v208
    %v210 = vrot.slane %v205, %v209
    %v212 = vadd.f32 %v202, %v210
    %v213 = vmax.f32 %v212, 0.0
    %v214 = vld [vmem:[#allocation3] sm:$0xff]
    %v215 = vld [vmem:[#allocation3 + $0x8] sm:$0xff]
    %v216 = vld [vmem:[#allocation3 + $0x10] sm:$0xff]
    %v217 = vld [vmem:[#allocation3 + $0x18] sm:$0xff]
    %v218 = vld [vmem:[#allocation3 + $0x20] sm:$0xff]
    %v219 = vld [vmem:[#allocation3 + $0x28] sm:$0xff]
    %v220 = vld [vmem:[#allocation3 + $0x30] sm:$0xff]
    %v221 = vld [vmem:[#allocation3 + $0x38] sm:$0xff]
    %v222 = vld [vmem:[#allocation3 + $0x40] sm:$0xff]
    %v223 = vld [vmem:[#allocation3 + $0x48] sm:$0xff]
    %v224 = vld [vmem:[#allocation3 + $0x50] sm:$0xff]
    %v225 = vld [vmem:[#allocation3 + $0x58] sm:$0xff]
    %v226 = vld [vmem:[#allocation3 + $0x60] sm:$0xff]
    %v227 = vld [vmem:[#allocation3 + $0x68] sm:$0xff]
    %v228 = vld [vmem:[#allocation3 + $0x70] sm:$0xff]
    %v229 = vld [vmem:[#allocation3 + $0x78] sm:$0xff]
    %v230 = vld [vmem:[%s6] sm:$0x1]
    %v232 = vlaneseq
    %v233 = vshrl.u32 %v232, 7
    %v234 = vsub.s32 0, %v233
    %v235 = vrot.slane %v230, %v234
    %237 = vmatprep.subr.mxu0 0.0
    %238 = vmatpush1.msra.mxu0 %v214
    %239 = vmatprep.subr.mxu0 0.0
    %240 = vmatpush1.msra.mxu0 %v215
    %241 = vmatprep.subr.mxu0 0.0
    %242 = vmatpush1.msra.mxu0 %v216
    %243 = vmatprep.subr.mxu0 0.0
    %244 = vmatpush1.msra.mxu0 %v217
    %245 = vmatprep.subr.mxu0 0.0
    %246 = vmatpush1.msra.mxu0 %v218
    %247 = vmatprep.subr.mxu0 0.0
    %248 = vmatpush1.msra.mxu0 %v219
    %249 = vmatprep.subr.mxu0 0.0
    %250 = vmatpush1.msra.mxu0 %v220
    %251 = vmatprep.subr.mxu0 0.0
    %252 = vmatpush1.msra.mxu0 %v221
    %253 = vmatprep.subr.mxu0 0.0
    %254 = vmatpush1.msra.mxu0 %v222
    %255 = vmatprep.subr.mxu0 0.0
    %256 = vmatpush1.msra.mxu0 %v223
    %257 = vmatprep.subr.mxu0 0.0
    %258 = vmatpush1.msra.mxu0 %v224
    %259 = vmatprep.subr.mxu0 0.0
    %260 = vmatpush1.msra.mxu0 %v225
    %261 = vmatprep.subr.mxu0 0.0
    %262 = vmatpush1.msra.mxu0 %v226
    %263 = vmatprep.subr.mxu0 0.0
    %264 = vmatpush1.msra.mxu0 %v227
    %265 = vmatprep.subr.mxu0 0.0
    %266 = vmatpush1.msra.mxu0 %v228
    %267 = vmatprep.subr.mxu0 0.0
    %268 = vmatpush1.msra.mxu0 %v229
    %269 = vmatprep.subr.mxu0 0.0
    %270 = vmatpush1.msra.mxu0 0.0
    %271 = vmatprep.subr.mxu0 0.0
    %272 = vmatpush1.msra.mxu0 0.0
    %273 = vmatprep.subr.mxu0 0.0
    %274 = vmatpush1.msra.mxu0 0.0
    %275 = vmatprep.subr.mxu0 0.0
    %276 = vmatpush1.msra.mxu0 0.0
    %277 = vmatprep.subr.mxu0 0.0
    %278 = vmatpush1.msra.mxu0 0.0
    %279 = vmatprep.subr.mxu0 0.0
    %280 = vmatpush1.msra.mxu0 0.0
    %281 = vmatprep.subr.mxu0 0.0
    %282 = vmatpush1.msra.mxu0 0.0
    %283 = vmatprep.subr.mxu0 0.0
    %284 = vmatpush1.msra.mxu0 0.0
    %285 = vmatprep.subr.mxu0 0.0
    %286 = vmatpush1.msra.mxu0 0.0
    %287 = vmatprep.subr.mxu0 0.0
    %288 = vmatpush1.msra.mxu0 0.0
    %289 = vmatprep.subr.mxu0 0.0
    %290 = vmatpush1.msra.mxu0 0.0
    %291 = vmatprep.subr.mxu0 0.0
    %292 = vmatpush1.msra.mxu0 0.0
    %293 = vmatprep.subr.mxu0 0.0
    %294 = vmatpush1.msra.mxu0 0.0
    %295 = vmatprep.subr.mxu0 0.0
    %296 = vmatpush1.msra.mxu0 0.0
    %297 = vmatprep.subr.mxu0 0.0
    %298 = vmatpush1.msra.mxu0 0.0
    %299 = vmatprep.subr.mxu0 0.0
    %300 = vmatpush1.msra.mxu0 0.0
    %301 = vmatprep.mubr.f32.mxu0 0.0
    %302 = vmatmul.mubr.f32.gmra.mrb[0].mxu0 %v213
    %v303 = vpop.f32.mrb[0].mxu0
    %v304 = vadd.f32 %v235, %v303
    %v305 = vpop.f32.mrb[0].mxu0
    %306 = vdwg.mxu0
    %v307 = vmax.f32 %v304, 0.0
    %v308 = vld [vmem:[%s7] sm:$0x1]
    %v310 = vlaneseq
    %v311 = vshrl.u32 %v310, 7
    %v312 = vsub.s32 0, %v311
    %v313 = vrot.slane %v308, %v312
    %v315 = vmul.f32 %v307, %v313
    %316 = vadd.xlane.f32.xlu0 %v315
    %v317 = vpop.xlane.xlu0 %316
    %v318 = vld [vmem:[#allocation2] sm:$0x1]
    %v320 = vlaneseq
    %v321 = vshrl.u32 %v320, 7
    %v322 = vsub.s32 0, %v321
    %v323 = vrot.slane %v318, %v322
    %v325 = vadd.f32 %v317, %v323
    %vm326 = vcmask 7168
    %327 = vst.msk [vmem:[%s9] sm:$0xff] %vm326, %v325
    // Predicated region
    $region42: #{critic_forward.1} parent=1 // pred_check
      _
    $region43: #{critic_forward.1} parent=1 // pred_check_branch
      %329 = sbr.rel (0) target = $region45
    $region44: #{critic_forward.1} parent=1 // pred_region
      _
    $region45: #{critic_forward.1} parent=1 // pred_fallthru
      _
    // Predicated region
    $region46: #{critic_forward.1} parent=1 // pred_check
      _
    $region47: #{critic_forward.1} parent=1 // pred_check_branch
      %331 = sbr.rel (0) target = $region49
    $region48: #{critic_forward.1} parent=1 // pred_region
      _
    $region49: #{critic_forward.1} parent=1 // pred_fallthru
      _
    %332 = vsyncpa [#allocation4], 1

</llo_original>
